<compile_context>
chip_gen: v5e
topology: v5e:2x2
jax: 0.10.0
libtpu: 0.0.40
codegen_flags: <defaults>
</compile_context>

<pallas_src>
import jax
import jax.numpy as jnp
from jax import lax
from jax.experimental import pallas as pl
from jax.experimental.pallas import tpu as pltpu

LANE = 128


def _round_up(a, b):
    return (a + b - 1) // b * b


def _make_kernel(T, b_blk, t_tile, nt):
    """Build the kernel with all shape statics baked in (recompiles per shape,
    which is what jit does anyway)."""
    sub = min(8, b_blk)                      # sublane chunk (1 vreg of rows)
    rem = T - (nt - 1) * t_tile              # valid lanes in the last T tile
    full_groups = t_tile // LANE

    def kernel(x_ref, y_ref, o_ref, acc_x, acc_y, acc_xy, acc_xx, acc_yy):
        k = pl.program_id(1)                 # T-tile (reduction) index

        @pl.when(k == 0)
        def _init():
            acc_x[...] = jnp.zeros_like(acc_x)
            acc_y[...] = jnp.zeros_like(acc_y)
            acc_xy[...] = jnp.zeros_like(acc_xy)
            acc_xx[...] = jnp.zeros_like(acc_xx)
            acc_yy[...] = jnp.zeros_like(acc_yy)

        def accumulate(n_full, tail):
            """Fold this tile into the (b_blk, 128) lane-partial accumulators.

            n_full: number of fully-valid 128-lane groups (static).
            tail:   valid lanes of the one partial group after them (static,
                    0 => none).  Groups beyond that are never loaded.
            """
            for rr in range(0, b_blk, sub):          # static sublane chunks
                def load(off):
                    xs = x_ref[pl.ds(rr, sub), pl.ds(off, LANE)]
                    ys = y_ref[pl.ds(rr, sub), pl.ds(off, LANE)]
                    return xs.astype(jnp.float32), ys.astype(jnp.float32)

                def add(parts, xs, ys):
                    px, py, pxy, pxx, pyy = parts
                    return (px + xs, py + ys, pxy + xs * ys,
                            pxx + xs * xs, pyy + ys * ys)

                parts = tuple(jnp.zeros((sub, LANE), jnp.float32)
                              for _ in range(5))

                if 0 < n_full <= 8:                  # short: static unroll
                    for j in range(n_full):
                        parts = add(parts, *load(j * LANE))
                elif n_full > 8:                     # long: rolled, unroll x8
                    def body(j, carry):
                        off = pl.multiple_of(j * LANE, LANE)
                        return add(carry, *load(off))
                    parts = lax.fori_loop(0, n_full, body, parts,
                                          unroll=min(8, n_full))

                if tail:                             # static partial group
                    xs, ys = load(n_full * LANE)
                    keep = lax.broadcasted_iota(jnp.int32, (sub, LANE), 1) < tail
                    xs = jnp.where(keep, xs, 0.0)
                    ys = jnp.where(keep, ys, 0.0)
                    parts = add(parts, xs, ys)

                px, py, pxy, pxx, pyy = parts
                # One load/add/store per quantity per sublane chunk per tile.
                acc_x[pl.ds(rr, sub), :] += px
                acc_y[pl.ds(rr, sub), :] += py
                acc_xy[pl.ds(rr, sub), :] += pxy
                acc_xx[pl.ds(rr, sub), :] += pxx
                acc_yy[pl.ds(rr, sub), :] += pyy

        if rem == t_tile:
            # T is a multiple of t_tile: no tile is ever ragged, single path.
            accumulate(full_groups, 0)
        else:
            if nt > 1:
                @pl.when(k < nt - 1)
                def _full_tiles():
                    accumulate(full_groups, 0)

            @pl.when(k == nt - 1)
            def _ragged_tile():
                accumulate(rem // LANE, rem % LANE)

        @pl.when(k == nt - 1)
        def _finalize():
            Tf = jnp.float32(T)
            sx = jnp.sum(acc_x[...], axis=1, keepdims=True)
            sy = jnp.sum(acc_y[...], axis=1, keepdims=True)
            sxy = jnp.sum(acc_xy[...], axis=1, keepdims=True)
            sxx = jnp.sum(acc_xx[...], axis=1, keepdims=True)
            syy = jnp.sum(acc_yy[...], axis=1, keepdims=True)
            num = Tf * sxy - sx * sy
            var = (Tf * sxx - sx * sx) * (Tf * syy - sy * sy)
            # var == 0 (constant row) -> nan, same as the torch reference.
            o_ref[...] = jnp.float32(1.0) - num * lax.rsqrt(var)

    return kernel


def _choose_tiles(B, T, itemsize, t_tile=None, b_blk=None):
    """Pick (b_blk, t_tile) so each grid step moves >= ~0.5 MiB per input while
    double-buffered inputs stay under a ~24 MiB VMEM budget (v7x-safe)."""
    T128 = _round_up(T, LANE)
    max_t_tile = 16384                    # lane cap (keeps the fold loop short)
    in_budget = 24 << 20                  # bytes for 2 inputs x 2 pipeline bufs
    per_elem = 2 * 2 * itemsize

    # --- batch block ---------------------------------------------------------
    if B < 8:
        b_blk = B
        b_cap = B
    elif b_blk is not None:
        b_blk = max(8, min(_round_up(B, 8), _round_up(int(b_blk), 8)))
        b_cap = b_blk
    else:
        b_blk = 8
        # Keep >= 2 "parallel" batch blocks whenever B allows (v7x dual-TC).
        b_cap = 8 if B < 16 else min(128, max(8, (B // 2) // 8 * 8))

    # --- T tile: grow first (contiguous row DMA), cover all of T if it fits ---
    if t_tile is not None:
        t_tile = max(LANE, min(T128, _round_up(int(t_tile), LANE)))
    else:
        t_fit = max(LANE, in_budget // (per_elem * b_blk) // LANE * LANE)
        t_tile = min(T128, max_t_tile, t_fit)

    # --- then grow the batch block inside the remaining input budget ----------
    if B >= 8 and b_cap > b_blk:
        b_fit = max(8, in_budget // (per_elem * t_tile) // 8 * 8)
        b_blk = min(b_cap, b_fit)

    nb = -(-B // b_blk)
    nt = -(-T // t_tile)
    return b_blk, t_tile, nb, nt


def neg_pearson_loss(x, y, *, t_tile=None, b_blk=None):
    """JAX/Pallas equivalent of Neg_Pearson().forward(x, y)."""
    x = jnp.asarray(x)
    y = jnp.asarray(y)
    if x.ndim == 1:
        x = x[None, :]
        y = y[None, :]
    assert x.ndim == 2 and x.shape == y.shape
    B, T = x.shape

    b_blk, t_tile, nb, nt = _choose_tiles(B, T, x.dtype.itemsize, t_tile, b_blk)

    # --- explicit VMEM budget (generation-aware, v7x 64 MiB safe) -------------
    in_bytes = 2 * 2 * b_blk * t_tile * x.dtype.itemsize
    acc_bytes = 5 * _round_up(b_blk, 8) * LANE * 4
    out_bytes = 2 * _round_up(b_blk, 8) * LANE * 4
    need = in_bytes + acc_bytes + out_bytes
    try:
        vmem_phys = int(pltpu.get_tpu_info().vmem_capacity_bytes)
    except Exception:
        vmem_phys = 64 << 20              # conservative: v7x per-TC VMEM
    vmem_limit = max(16 << 20, need + (8 << 20))
    vmem_limit = min(vmem_limit, max(int(0.6 * vmem_phys), need + (2 << 20)))

    kernel = _make_kernel(T, b_blk, t_tile, nt)

    # NOTE: if a trace ever shows exposed DMA, add
    # pipeline_mode=pl.Buffered(3) on the two input BlockSpecs.
    losses = pl.pallas_call(
        kernel,
        out_shape=jax.ShapeDtypeStruct((B, 1), jnp.float32),
        grid_spec=pltpu.PrefetchScalarGridSpec(
            num_scalar_prefetch=0,
            grid=(nb, nt),                                  # reduction axis last
            in_specs=[
                pl.BlockSpec((b_blk, t_tile), lambda b, k: (b, k)),
                pl.BlockSpec((b_blk, t_tile), lambda b, k: (b, k)),
            ],
            out_specs=pl.BlockSpec((b_blk, 1), lambda b, k: (b, 0)),
            scratch_shapes=[pltpu.VMEM((b_blk, LANE), jnp.float32)] * 5,
        ),
        compiler_params=pltpu.CompilerParams(
            dimension_semantics=("parallel", "arbitrary"),
            vmem_limit_bytes=int(vmem_limit),
        ),
    )(x, y)

    # Per-row losses -> scalar mean (wrapper side, so the kernel can shard the
    # batch axis across cores).
    return jnp.mean(losses)


def _reference(x, y):
    """Pure-JAX reference mirroring the PyTorch forward (f32 accumulation)."""
    x = jnp.asarray(x, jnp.float32)
    y = jnp.asarray(y, jnp.float32)
    if x.ndim == 1:
        x = x[None, :]
        y = y[None, :]
    T = x.shape[1]
    sx = jnp.sum(x, axis=1)
    sy = jnp.sum(y, axis=1)
    num = T * jnp.sum(x * y, axis=1) - sx * sy
    den = jnp.sqrt((T * jnp.sum(x * x, axis=1) - sx ** 2)
                   * (T * jnp.sum(y * y, axis=1) - sy ** 2))
    return jnp.mean(1.0 - num / den)


if __name__ == "__main__":
    key = jax.random.PRNGKey(0)
    kx, ky, kz, kw = jax.random.split(key, 4)

    # Case 1: small 2-D batch, T not a multiple of 128 (single ragged tile).
    B, T = 2, 200
    x = jax.random.normal(kx, (B, T), dtype=jnp.float32)
    y = 0.7 * x + 0.3 * jax.random.normal(ky, (B, T), dtype=jnp.float32)
    out = jax.block_until_ready(neg_pearson_loss(x, y))
    ref = jax.block_until_ready(_reference(x, y))
    assert jnp.allclose(out, ref, rtol=1e-4, atol=1e-5), (out, ref)

    # Case 2: 1-D inputs (torch unsqueeze branch).
    out1 = jax.block_until_ready(neg_pearson_loss(x[0], y[0]))
    ref1 = jax.block_until_ready(_reference(x[0], y[0]))
    assert jnp.allclose(out1, ref1, rtol=1e-4, atol=1e-5), (out1, ref1)

    # Case 3: forced multi-tile reduction (t_tile=128 -> 3 tiles, ragged last)
    # plus a partial batch block (B=10, b_blk=8 -> 2 parallel blocks).
    B2, T2 = 10, 300
    x2 = jax.random.normal(kz, (B2, T2), dtype=jnp.float32)
    y2 = 0.5 * x2 + 0.5 * jax.random.normal(kw, (B2, T2), dtype=jnp.float32)
    out2 = jax.block_until_ready(neg_pearson_loss(x2, y2, t_tile=128, b_blk=8))
    ref2 = jax.block_until_ready(_reference(x2, y2))
    assert jnp.allclose(out2, ref2, rtol=1e-4, atol=1e-5), (out2, ref2)

    # Case 4: longer T (exercises the fori_loop lane-group fold), bf16 inputs,
    # default tile selection, >= 2 parallel batch blocks.
    B3, T3 = 16, 2500
    x3 = jax.random.normal(kx, (B3, T3), dtype=jnp.float32)
    y3 = 0.6 * x3 + 0.4 * jax.random.normal(ky, (B3, T3), dtype=jnp.float32)
    x3b, y3b = x3.astype(jnp.bfloat16), y3.astype(jnp.bfloat16)
    out3 = jax.block_until_ready(neg_pearson_loss(x3b, y3b))
    ref3 = jax.block_until_ready(_reference(x3b, y3b))
    assert jnp.allclose(out3, ref3, rtol=1e-3, atol=1e-4), (out3, ref3)

    print("KERNEL_OK")
</pallas_src>

<mosaic_0001>
module attributes {stable_mosaic.version = 11 : i64} {
  func.func @kernel(%arg0: i32, %arg1: i32, %arg2: memref<2x256xf32, #tpu.memory_space<vmem>>, %arg3: memref<2x256xf32, #tpu.memory_space<vmem>>, %arg4: memref<2x1xf32, #tpu.memory_space<vmem>>, %arg5: memref<2x128xf32, #tpu.memory_space<vmem>>, %arg6: memref<2x128xf32, #tpu.memory_space<vmem>>, %arg7: memref<2x128xf32, #tpu.memory_space<vmem>>, %arg8: memref<2x128xf32, #tpu.memory_space<vmem>>, %arg9: memref<2x128xf32, #tpu.memory_space<vmem>>) attributes {dimension_semantics = [#tpu.dimension_semantics<parallel>, #tpu.dimension_semantics<arbitrary>], iteration_bounds = array<i64: 1, 1>, scalar_prefetch = 0 : i64, scratch_operands = 5 : i64, tpu.core_type = #tpu.core_type<tc>, window_params = [{transform_indices = @transform_0, window_bounds = array<i64: 2, 256>}, {transform_indices = @transform_1, window_bounds = array<i64: 2, 256>}, {transform_indices = @transform_2, window_bounds = array<i64: 2, 1>}]} {
    %c0_i32 = arith.constant 0 : i32
    %0 = arith.cmpi eq, %arg1, %c0_i32 : i32
    %1 = arith.extui %0 : i1 to i32
    %c0_i32_0 = arith.constant 0 : i32
    %2 = arith.cmpi ne, %1, %c0_i32_0 : i32
    scf.if %2 {
      %cst = arith.constant 0.000000e+00 : f32
      %9 = vector.broadcast %cst : f32 to vector<2x128xf32>
      %c0 = arith.constant 0 : index
      %c0_5 = arith.constant 0 : index
      %10 = vector.load %arg5[%c0, %c0_5] : memref<2x128xf32, #tpu.memory_space<vmem>>, vector<2x128xf32>
      tpu.vector_store %arg5[%c0, %c0_5], %9 {strides = array<i32>} : memref<2x128xf32, #tpu.memory_space<vmem>>, vector<2x128xf32>,
      %cst_6 = arith.constant 0.000000e+00 : f32
      %11 = vector.broadcast %cst_6 : f32 to vector<2x128xf32>
      %c0_7 = arith.constant 0 : index
      %c0_8 = arith.constant 0 : index
      %12 = vector.load %arg6[%c0_7, %c0_8] : memref<2x128xf32, #tpu.memory_space<vmem>>, vector<2x128xf32>
      tpu.vector_store %arg6[%c0_7, %c0_8], %11 {strides = array<i32>} : memref<2x128xf32, #tpu.memory_space<vmem>>, vector<2x128xf32>,
      %cst_9 = arith.constant 0.000000e+00 : f32
      %13 = vector.broadcast %cst_9 : f32 to vector<2x128xf32>
      %c0_10 = arith.constant 0 : index
      %c0_11 = arith.constant 0 : index
      %14 = vector.load %arg7[%c0_10, %c0_11] : memref<2x128xf32, #tpu.memory_space<vmem>>, vector<2x128xf32>
      tpu.vector_store %arg7[%c0_10, %c0_11], %13 {strides = array<i32>} : memref<2x128xf32, #tpu.memory_space<vmem>>, vector<2x128xf32>,
      %cst_12 = arith.constant 0.000000e+00 : f32
      %15 = vector.broadcast %cst_12 : f32 to vector<2x128xf32>
      %c0_13 = arith.constant 0 : index
      %c0_14 = arith.constant 0 : index
      %16 = vector.load %arg8[%c0_13, %c0_14] : memref<2x128xf32, #tpu.memory_space<vmem>>, vector<2x128xf32>
      tpu.vector_store %arg8[%c0_13, %c0_14], %15 {strides = array<i32>} : memref<2x128xf32, #tpu.memory_space<vmem>>, vector<2x128xf32>,
      %cst_15 = arith.constant 0.000000e+00 : f32
      %17 = vector.broadcast %cst_15 : f32 to vector<2x128xf32>
      %c0_16 = arith.constant 0 : index
      %c0_17 = arith.constant 0 : index
      %18 = vector.load %arg9[%c0_16, %c0_17] : memref<2x128xf32, #tpu.memory_space<vmem>>, vector<2x128xf32>
      tpu.vector_store %arg9[%c0_16, %c0_17], %17 {strides = array<i32>} : memref<2x128xf32, #tpu.memory_space<vmem>>, vector<2x128xf32>,
    } else {
    }
    %c0_i32_1 = arith.constant 0 : i32
    %3 = arith.cmpi eq, %arg1, %c0_i32_1 : i32
    %4 = arith.extui %3 : i1 to i32
    %c0_i32_2 = arith.constant 0 : i32
    %5 = arith.cmpi ne, %4, %c0_i32_2 : i32
    scf.if %5 {
      %cst = arith.constant 0.000000e+00 : f32
      %9 = vector.broadcast %cst : f32 to vector<2x128xf32>
      %cst_5 = arith.constant 0.000000e+00 : f32
      %10 = vector.broadcast %cst_5 : f32 to vector<2x128xf32>
      %cst_6 = arith.constant 0.000000e+00 : f32
      %11 = vector.broadcast %cst_6 : f32 to vector<2x128xf32>
      %cst_7 = arith.constant 0.000000e+00 : f32
      %12 = vector.broadcast %cst_7 : f32 to vector<2x128xf32>
      %cst_8 = arith.constant 0.000000e+00 : f32
      %13 = vector.broadcast %cst_8 : f32 to vector<2x128xf32>
      %c0 = arith.constant 0 : index
      %c0_9 = arith.constant 0 : index
      %14 = vector.load %arg2[%c0, %c0_9] : memref<2x256xf32, #tpu.memory_space<vmem>>, vector<2x128xf32>
      %c0_10 = arith.constant 0 : index
      %c0_11 = arith.constant 0 : index
      %15 = vector.load %arg3[%c0_10, %c0_11] : memref<2x256xf32, #tpu.memory_space<vmem>>, vector<2x128xf32>
      %16 = arith.addf %9, %14 : vector<2x128xf32>
      %17 = arith.addf %10, %15 : vector<2x128xf32>
      %18 = arith.mulf %14, %15 : vector<2x128xf32>
      %19 = arith.addf %11, %18 : vector<2x128xf32>
      %20 = arith.mulf %14, %14 : vector<2x128xf32>
      %21 = arith.addf %12, %20 : vector<2x128xf32>
      %22 = arith.mulf %15, %15 : vector<2x128xf32>
      %23 = arith.addf %13, %22 : vector<2x128xf32>
      %c0_12 = arith.constant 0 : index
      %c128 = arith.constant 128 : index
      %24 = vector.load %arg2[%c0_12, %c128] : memref<2x256xf32, #tpu.memory_space<vmem>>, vector<2x128xf32>
      %c0_13 = arith.constant 0 : index
      %c128_14 = arith.constant 128 : index
      %25 = vector.load %arg3[%c0_13, %c128_14] : memref<2x256xf32, #tpu.memory_space<vmem>>, vector<2x128xf32>
      %26 = tpu.iota {dimensions = array<i32: 1>} : vector<2x128xi32>
      %c72_i32 = arith.constant 72 : i32
      %27 = vector.broadcast %c72_i32 : i32 to vector<2x128xi32>
      %28 = arith.cmpi slt, %26, %27 : vector<2x128xi32>
      %cst_15 = arith.constant 0.000000e+00 : f32
      %29 = vector.broadcast %cst_15 : f32 to vector<2x128xf32>
      %30 = arith.select %28, %24, %29 : vector<2x128xi1>, vector<2x128xf32>
      %cst_16 = arith.constant 0.000000e+00 : f32
      %31 = vector.broadcast %cst_16 : f32 to vector<2x128xf32>
      %32 = arith.select %28, %25, %31 : vector<2x128xi1>, vector<2x128xf32>
      %33 = arith.addf %16, %30 : vector<2x128xf32>
      %34 = arith.addf %17, %32 : vector<2x128xf32>
      %35 = arith.mulf %30, %32 : vector<2x128xf32>
      %36 = arith.addf %19, %35 : vector<2x128xf32>
      %37 = arith.mulf %30, %30 : vector<2x128xf32>
      %38 = arith.addf %21, %37 : vector<2x128xf32>
      %39 = arith.mulf %32, %32 : vector<2x128xf32>
      %40 = arith.addf %23, %39 : vector<2x128xf32>
      %c0_17 = arith.constant 0 : index
      %c0_18 = arith.constant 0 : index
      %41 = vector.load %arg5[%c0_17, %c0_18] : memref<2x128xf32, #tpu.memory_space<vmem>>, vector<2x128xf32>
      %42 = arith.addf %41, %33 : vector<2x128xf32>
      %c0_19 = arith.constant 0 : index
      %c0_20 = arith.constant 0 : index
      %43 = vector.load %arg5[%c0_19, %c0_20] : memref<2x128xf32, #tpu.memory_space<vmem>>, vector<2x128xf32>
      tpu.vector_store %arg5[%c0_19, %c0_20], %42 {strides = array<i32>} : memref<2x128xf32, #tpu.memory_space<vmem>>, vector<2x128xf32>,
      %c0_21 = arith.constant 0 : index
      %c0_22 = arith.constant 0 : index
      %44 = vector.load %arg6[%c0_21, %c0_22] : memref<2x128xf32, #tpu.memory_space<vmem>>, vector<2x128xf32>
      %45 = arith.addf %44, %34 : vector<2x128xf32>
      %c0_23 = arith.constant 0 : index
      %c0_24 = arith.constant 0 : index
      %46 = vector.load %arg6[%c0_23, %c0_24] : memref<2x128xf32, #tpu.memory_space<vmem>>, vector<2x128xf32>
      tpu.vector_store %arg6[%c0_23, %c0_24], %45 {strides = array<i32>} : memref<2x128xf32, #tpu.memory_space<vmem>>, vector<2x128xf32>,
      %c0_25 = arith.constant 0 : index
      %c0_26 = arith.constant 0 : index
      %47 = vector.load %arg7[%c0_25, %c0_26] : memref<2x128xf32, #tpu.memory_space<vmem>>, vector<2x128xf32>
      %48 = arith.addf %47, %36 : vector<2x128xf32>
      %c0_27 = arith.constant 0 : index
      %c0_28 = arith.constant 0 : index
      %49 = vector.load %arg7[%c0_27, %c0_28] : memref<2x128xf32, #tpu.memory_space<vmem>>, vector<2x128xf32>
      tpu.vector_store %arg7[%c0_27, %c0_28], %48 {strides = array<i32>} : memref<2x128xf32, #tpu.memory_space<vmem>>, vector<2x128xf32>,
      %c0_29 = arith.constant 0 : index
      %c0_30 = arith.constant 0 : index
      %50 = vector.load %arg8[%c0_29, %c0_30] : memref<2x128xf32, #tpu.memory_space<vmem>>, vector<2x128xf32>
      %51 = arith.addf %50, %38 : vector<2x128xf32>
      %c0_31 = arith.constant 0 : index
      %c0_32 = arith.constant 0 : index
      %52 = vector.load %arg8[%c0_31, %c0_32] : memref<2x128xf32, #tpu.memory_space<vmem>>, vector<2x128xf32>
      tpu.vector_store %arg8[%c0_31, %c0_32], %51 {strides = array<i32>} : memref<2x128xf32, #tpu.memory_space<vmem>>, vector<2x128xf32>,
      %c0_33 = arith.constant 0 : index
      %c0_34 = arith.constant 0 : index
      %53 = vector.load %arg9[%c0_33, %c0_34] : memref<2x128xf32, #tpu.memory_space<vmem>>, vector<2x128xf32>
      %54 = arith.addf %53, %40 : vector<2x128xf32>
      %c0_35 = arith.constant 0 : index
      %c0_36 = arith.constant 0 : index
      %55 = vector.load %arg9[%c0_35, %c0_36] : memref<2x128xf32, #tpu.memory_space<vmem>>, vector<2x128xf32>
      tpu.vector_store %arg9[%c0_35, %c0_36], %54 {strides = array<i32>} : memref<2x128xf32, #tpu.memory_space<vmem>>, vector<2x128xf32>,
    } else {
    }
    %c0_i32_3 = arith.constant 0 : i32
    %6 = arith.cmpi eq, %arg1, %c0_i32_3 : i32
    %7 = arith.extui %6 : i1 to i32
    %c0_i32_4 = arith.constant 0 : i32
    %8 = arith.cmpi ne, %7, %c0_i32_4 : i32
    scf.if %8 {
      %c0 = arith.constant 0 : index
      %c0_5 = arith.constant 0 : index
      %9 = vector.load %arg5[%c0, %c0_5] : memref<2x128xf32, #tpu.memory_space<vmem>>, vector<2x128xf32>
      %cst = arith.constant dense<0.000000e+00> : vector<2xf32>
      %10 = vector.multi_reduction <add>, %9, %cst [1] : vector<2x128xf32> to vector<2xf32>
      %11 = vector.shape_cast %10 : vector<2xf32> to vector<2x1xf32>
      %c0_6 = arith.constant 0 : index
      %c0_7 = arith.constant 0 : index
      %12 = vector.load %arg6[%c0_6, %c0_7] : memref<2x128xf32, #tpu.memory_space<vmem>>, vector<2x128xf32>
      %cst_8 = arith.constant dense<0.000000e+00> : vector<2xf32>
      %13 = vector.multi_reduction <add>, %12, %cst_8 [1] : vector<2x128xf32> to vector<2xf32>
      %14 = vector.shape_cast %13 : vector<2xf32> to vector<2x1xf32>
      %c0_9 = arith.constant 0 : index
      %c0_10 = arith.constant 0 : index
      %15 = vector.load %arg7[%c0_9, %c0_10] : memref<2x128xf32, #tpu.memory_space<vmem>>, vector<2x128xf32>
      %cst_11 = arith.constant dense<0.000000e+00> : vector<2xf32>
      %16 = vector.multi_reduction <add>, %15, %cst_11 [1] : vector<2x128xf32> to vector<2xf32>
      %17 = vector.shape_cast %16 : vector<2xf32> to vector<2x1xf32>
      %c0_12 = arith.constant 0 : index
      %c0_13 = arith.constant 0 : index
      %18 = vector.load %arg8[%c0_12, %c0_13] : memref<2x128xf32, #tpu.memory_space<vmem>>, vector<2x128xf32>
      %cst_14 = arith.constant dense<0.000000e+00> : vector<2xf32>
      %19 = vector.multi_reduction <add>, %18, %cst_14 [1] : vector<2x128xf32> to vector<2xf32>
      %20 = vector.shape_cast %19 : vector<2xf32> to vector<2x1xf32>
      %c0_15 = arith.constant 0 : index
      %c0_16 = arith.constant 0 : index
      %21 = vector.load %arg9[%c0_15, %c0_16] : memref<2x128xf32, #tpu.memory_space<vmem>>, vector<2x128xf32>
      %cst_17 = arith.constant dense<0.000000e+00> : vector<2xf32>
      %22 = vector.multi_reduction <add>, %21, %cst_17 [1] : vector<2x128xf32> to vector<2xf32>
      %23 = vector.shape_cast %22 : vector<2xf32> to vector<2x1xf32>
      %cst_18 = arith.constant 2.000000e+02 : f32
      %24 = vector.broadcast %cst_18 : f32 to vector<2x1xf32>
      %25 = arith.mulf %24, %17 : vector<2x1xf32>
      %26 = arith.mulf %11, %14 : vector<2x1xf32>
      %27 = arith.subf %25, %26 : vector<2x1xf32>
      %cst_19 = arith.constant 2.000000e+02 : f32
      %28 = vector.broadcast %cst_19 : f32 to vector<2x1xf32>
      %29 = arith.mulf %28, %20 : vector<2x1xf32>
      %30 = arith.mulf %11, %11 : vector<2x1xf32>
      %31 = arith.subf %29, %30 : vector<2x1xf32>
      %cst_20 = arith.constant 2.000000e+02 : f32
      %32 = vector.broadcast %cst_20 : f32 to vector<2x1xf32>
      %33 = arith.mulf %32, %23 : vector<2x1xf32>
      %34 = arith.mulf %14, %14 : vector<2x1xf32>
      %35 = arith.subf %33, %34 : vector<2x1xf32>
      %36 = arith.mulf %31, %35 : vector<2x1xf32>
      %37 = math.rsqrt %36 : vector<2x1xf32>
      %38 = arith.mulf %27, %37 : vector<2x1xf32>
      %cst_21 = arith.constant 1.000000e+00 : f32
      %39 = vector.broadcast %cst_21 : f32 to vector<2x1xf32>
      %40 = arith.subf %39, %38 : vector<2x1xf32>
      %c0_22 = arith.constant 0 : index
      %c0_23 = arith.constant 0 : index
      %41 = vector.load %arg4[%c0_22, %c0_23] : memref<2x1xf32, #tpu.memory_space<vmem>>, vector<2x1xf32>
      tpu.vector_store %arg4[%c0_22, %c0_23], %40 {strides = array<i32>} : memref<2x1xf32, #tpu.memory_space<vmem>>, vector<2x1xf32>,
    } else {
    }
    return
  }
  func.func @transform_0(%arg0: i32, %arg1: i32) -> (i32, i32) {
    %c0_i32 = arith.constant 0 : i32
    return %arg0, %arg1 : i32, i32
  }
  func.func @transform_1(%arg0: i32, %arg1: i32) -> (i32, i32) {
    %c0_i32 = arith.constant 0 : i32
    return %arg0, %arg1 : i32, i32
  }
  func.func @transform_2(%arg0: i32, %arg1: i32) -> (i32, i32) {
    %c0_i32 = arith.constant 0 : i32
    %c0_i32_0 = arith.constant 0 : i32
    return %arg0, %c0_i32 : i32, i32
  }
}

</mosaic_0001>

<llo_original>
// kernel: tpu_custom_call.1
$region0: #{tpu_custom_call.1}
  #allocation0 [shape = 'u32[]', space=smem, size = 0x4, offset = 0x4, fixed_abs, tag = 'smem constant byte address 0x4 - core index']
  #allocation1 [shape = 'u32[72,128]{1,0:T(1,128)}', space=vmem, size = 0x9000, scoped, tag = 'internal scratch']
  #allocation2 [shape = 'f32[2,128]{1,0:T(2,128)}', space=vmem, size = 0x400, scoped, tag = 'scratch operand']
  #allocation3 [shape = 'f32[2,128]{1,0:T(2,128)}', space=vmem, size = 0x400, scoped, tag = 'scratch operand']
  #allocation4 [shape = 'f32[2,128]{1,0:T(2,128)}', space=vmem, size = 0x400, scoped, tag = 'scratch operand']
  #allocation5 [shape = 'f32[2,128]{1,0:T(2,128)}', space=vmem, size = 0x400, scoped, tag = 'scratch operand']
  #allocation6 [shape = 'f32[2,128]{1,0:T(2,128)}', space=vmem, size = 0x400, scoped, tag = 'scratch operand']
  %s0 = inlined_call_operand.hbm [shape: f32[2,200], index: 0, kind: input, shape index: {}]
  %s1 = inlined_call_operand.hbm [shape: f32[2,200], index: 1, kind: input, shape index: {}]
  %s2 = inlined_call_operand.vmem [shape: f32[2,1], index: 2, kind: output, shape index: {}]
  %s3 = sld [smem:[#allocation0]]
  $region30: #{tpu_custom_call.1} parent=0
    _
  %s5 = ssub.s32 1, %s3
  %s6 = scalar_select 0, %s5, %s3
  $region1: #{tpu_custom_call.1} parent=0
    #allocation7 [shape = 'u8[2048]{0}', space=vmem, size = 0x800, scoped, tag = 'input window, operand 0, single buffered']
    #allocation8 [shape = 's32[1]{0}', space=sflag, size = 0x4, scoped, tag = 'scoped memory for tpu_custom_call.1']
    #allocation9 [shape = 'u8[2048]{0}', space=vmem, size = 0x800, scoped, tag = 'input window, operand 1, single buffered']
    #allocation10 [shape = 's32[1]{0}', space=sflag, size = 0x4, scoped, tag = 'scoped memory for tpu_custom_call.1']
    %7 = vsyncpa [#allocation8], 0
    %8 = vsyncpa [#allocation10], 0
    // Predicated region
    $region2: #{tpu_custom_call.1} parent=1 // pred_check
      _
    $region3: #{tpu_custom_call.1} parent=1 // pred_check_branch
      %10 = sbr.rel (0) target = $region5
    $region4: #{tpu_custom_call.1} parent=1 // pred_region
      %12 = vsyncadd [#allocation8], 0
      %s14 = sshll.u32 %s0, 4
      %s15 = int_to_ptr.hbm [resolvable:$true] %s14
      %s16 = sshll.u32 [#allocation7], 4
      %s17 = int_to_ptr.vmem [resolvable:$true] %s16
      %19 = dma.hbm_to_vmem [thread:$0]  %s15, 64, %s17, [#allocation8]
    $region5: #{tpu_custom_call.1} parent=1 // pred_fallthru
      _
    // Predicated region
    $region6: #{tpu_custom_call.1} parent=1 // pred_check
      _
    $region7: #{tpu_custom_call.1} parent=1 // pred_check_branch
      %21 = sbr.rel (0) target = $region9
    $region8: #{tpu_custom_call.1} parent=1 // pred_region
      %23 = vsyncadd [#allocation10], 0
      %s25 = sshll.u32 %s1, 4
      %s26 = int_to_ptr.hbm [resolvable:$true] %s25
      %s27 = sshll.u32 [#allocation9], 4
      %s28 = int_to_ptr.vmem [resolvable:$true] %s27
      %30 = dma.hbm_to_vmem [thread:$0]  %s26, 64, %s28, [#allocation10]
    $region9: #{tpu_custom_call.1} parent=1 // pred_fallthru
      _
    // Predicated region
    $region10: #{tpu_custom_call.1} parent=1 // pred_check
      _
    $region11: #{tpu_custom_call.1} parent=1 // pred_check_branch
      %32 = sbr.rel (0) target = $region13
    $region12: #{tpu_custom_call.1} parent=1 // pred_region
      %34 = dma.done [#allocation8], 64
    $region13: #{tpu_custom_call.1} parent=1 // pred_fallthru
      _
    // Predicated region
    $region14: #{tpu_custom_call.1} parent=1 // pred_check
      _
    $region15: #{tpu_custom_call.1} parent=1 // pred_check_branch
      %36 = sbr.rel (0) target = $region17
    $region16: #{tpu_custom_call.1} parent=1 // pred_region
      %38 = dma.done [#allocation10], 64
    $region17: #{tpu_custom_call.1} parent=1 // pred_fallthru
      _
    %p39 = scmp.eq.s32.totalorder 0, 0
    // Predicated region
    $region18: #{tpu_custom_call.1} parent=1 // pred_check
      %p40 = pneg %p39
    $region19: #{tpu_custom_call.1} parent=1 // pred_check_branch
      %42 = sbr.rel (%p40) target = $region21
    $region20: #{tpu_custom_call.1} parent=1 // pred_region
      %43 = vst [vmem:[#allocation2] sm:$0x3] 0.0
      %44 = vst [vmem:[#allocation3] sm:$0x3] 0.0
      %45 = vst [vmem:[#allocation4] sm:$0x3] 0.0
      %46 = vst [vmem:[#allocation5] sm:$0x3] 0.0
      %47 = vst [vmem:[#allocation6] sm:$0x3] 0.0
      %v48 = vld [vmem:[#allocation7] sm:$0x3]
      %v49 = vld [vmem:[#allocation9] sm:$0x3]
      %v50 = vadd.f32 %v48, 0.0
      %v51 = vadd.f32 %v49, 0.0
      %v52 = vmul.f32 %v48, %v49
      %v53 = vadd.f32 %v52, 0.0
      %v54 = vmul.f32 %v48, %v48
      %v55 = vadd.f32 %v54, 0.0
      %v56 = vmul.f32 %v49, %v49
      %v57 = vadd.f32 %v56, 0.0
      %v58 = vld [vmem:[#allocation7 + $0x2] sm:$0x3]
      %v59 = vld [vmem:[#allocation9 + $0x2] sm:$0x3]
      %v60 = vlaneseq
      %v61 = vand.u32 %v60, 127
      %vm62 = vcmp.lt.s32.totalorder %v61, 72
      %v63 = vsel %vm62, %v58, 0.0
      %v64 = vsel %vm62, %v59, 0.0
      %v65 = vadd.f32 %v50, %v63
      %v66 = vadd.f32 %v51, %v64
      %v67 = vmul.f32 %v63, %v64
      %v68 = vadd.f32 %v53, %v67
      %v69 = vmul.f32 %v63, %v63
      %v70 = vadd.f32 %v55, %v69
      %v71 = vmul.f32 %v64, %v64
      %v72 = vadd.f32 %v57, %v71
      %v73 = vld [vmem:[#allocation2] sm:$0x3]
      %v74 = vadd.f32 %v73, %v65
      %75 = vst [vmem:[#allocation2] sm:$0x3] %v74
      %v76 = vld [vmem:[#allocation3] sm:$0x3]
      %v77 = vadd.f32 %v76, %v66
      %78 = vst [vmem:[#allocation3] sm:$0x3] %v77
      %v79 = vld [vmem:[#allocation4] sm:$0x3]
      %v80 = vadd.f32 %v79, %v68
      %81 = vst [vmem:[#allocation4] sm:$0x3] %v80
      %v82 = vld [vmem:[#allocation5] sm:$0x3]
      %v83 = vadd.f32 %v82, %v70
      %84 = vst [vmem:[#allocation5] sm:$0x3] %v83
      %v85 = vld [vmem:[#allocation6] sm:$0x3]
      %v86 = vadd.f32 %v85, %v72
      %87 = vst [vmem:[#allocation6] sm:$0x3] %v86
      %v88 = vld [vmem:[#allocation2] sm:$0x3]
      %vm89 = vcmask 1041408
      %v90 = vsel %vm89, %v88, 0.0
      %91 = vadd.xlane.f32.xlu0 %v90
      %v92 = vpop.xlane.xlu0 %91
      %v93 = vld [vmem:[#allocation3] sm:$0x3]
      %v94 = vsel %vm89, %v93, 0.0
      %95 = vadd.xlane.f32.xlu0 %v94
      %v96 = vpop.xlane.xlu0 %95
      %v97 = vld [vmem:[#allocation4] sm:$0x3]
      %v98 = vsel %vm89, %v97, 0.0
      %99 = vadd.xlane.f32.xlu0 %v98
      %v100 = vpop.xlane.xlu0 %99
      %v101 = vld [vmem:[#allocation5] sm:$0x3]
      %v102 = vsel %vm89, %v101, 0.0
      %103 = vadd.xlane.f32.xlu0 %v102
      %v104 = vpop.xlane.xlu0 %103
      %v105 = vld [vmem:[#allocation6] sm:$0x3]
      %v106 = vsel %vm89, %v105, 0.0
      %107 = vadd.xlane.f32.xlu0 %v106
      %v108 = vpop.xlane.xlu0 %107
      %v109 = vmul.f32 %v100, 200.0
      %v110 = vmul.f32 %v92, %v96
      %v111 = vsub.f32 %v109, %v110
      %v112 = vmul.f32 %v104, 200.0
      %v113 = vmul.f32 %v92, %v92
      %v114 = vsub.f32 %v112, %v113
      %v115 = vmul.f32 %v108, 200.0
      %v116 = vmul.f32 %v96, %v96
      %v117 = vsub.f32 %v115, %v116
      %v118 = vmul.f32 %v114, %v117
      %v119 = vrsqrt.pop %v118
      %v120 = vmul.f32 %v119, %v118
      %v121 = vmul.f32 %v120, %v119
      %v122 = vmul.f32 0.5, %v121
      %v123 = vsub.f32 1.5, %v122
      %v124 = vmul.f32 %v119, %v123
      %vm125 = vweird.f32 %v118
      %vm126 = vweird.f32 %v119
      %vm127 = vmor %vm125, %vm126
      %v128 = vsel %vm127, %v119, %v124
      %v129 = vmul.f32 %v111, %v128
      %v130 = vsub.f32 1.0, %v129
      %vm131 = vcmask 1024
      %132 = vst.msk [vmem:[%s2] sm:$0x3] %vm131, %v130
    $region21: #{tpu_custom_call.1} parent=1 // pred_fallthru
      _
    // Predicated region
    $region22: #{tpu_custom_call.1} parent=1 // pred_check
      _
    $region23: #{tpu_custom_call.1} parent=1 // pred_check_branch
      %134 = sbr.rel (0) target = $region25
    $region24: #{tpu_custom_call.1} parent=1 // pred_region
      _
    $region25: #{tpu_custom_call.1} parent=1 // pred_fallthru
      _
    // Predicated region
    $region26: #{tpu_custom_call.1} parent=1 // pred_check
      _
    $region27: #{tpu_custom_call.1} parent=1 // pred_check_branch
      %136 = sbr.rel (0) target = $region29
    $region28: #{tpu_custom_call.1} parent=1 // pred_region
      _
    $region29: #{tpu_custom_call.1} parent=1 // pred_fallthru
      _
    %137 = vsyncpa [#allocation8], 1
    %138 = vsyncpa [#allocation10], 1

</llo_original>
